<compile_context>
chip_gen: v7x
topology: tpu7x:2x2x1
jax: 0.10.0
libtpu: 0.0.40
codegen_flags: <defaults>
</compile_context>

<pallas_src>
import jax
import jax.numpy as jnp
from jax.experimental import pallas as pl
from jax.experimental.pallas import tpu as pltpu


def _gcn_kernel(x_ref, w1_ref, m_ref, o_ref):
    # x_ref : (TB, N, F)  activations (input dtype), F = H*C
    # w1_ref: (TB, N, N)  node-mix weight (bf16, broadcast over TB)
    # m_ref : (F, F)      lifted channel-mix weight  I_H (x) W2^T  (bf16)
    tb, n, f = x_ref.shape

    x = x_ref[...]
    xf = x.astype(jnp.float32)     # residual path in f32
    xb = x.astype(jnp.bfloat16)    # MXU operand

    # 1x1 conv over the node dim, batched over the TB slices of this block.
    h = jnp.einsum("tnm,tmf->tnf", w1_ref[...], xb,
                   preferred_element_type=jnp.float32)
    h = jnp.maximum(h + xf, 0.0)   # relu(out + x) in f32

    # Linear over the channel dim as a single lane-dense 2-D GEMM.
    hr = h.astype(jnp.bfloat16).reshape(tb * n, f)
    y = jnp.dot(hr, m_ref[...], preferred_element_type=jnp.float32)

    o_ref[...] = y.reshape(tb, n, f).astype(o_ref.dtype)


def _pick_batch_tile(B, N, F, itemsize, budget_bytes):
    """Largest divisor of B whose (tb, N, F) block stays under budget_bytes."""
    per_slice = N * F * itemsize
    cap = max(1, budget_bytes // per_slice)
    tb = min(B, cap)
    while B % tb:
        tb -= 1
    return tb


def gcn_forward(x_nchw, w1, w2, *, block_bytes=2 << 20):
    """x_nchw: (B, N, H, C); w1: (N, N) conv1 weight; w2: (C, C) Linear weight."""
    B, N, H, C = x_nchw.shape
    F = H * C

    # Contiguous merges only -> no data movement, no extra HBM pass.
    x_slab = x_nchw.reshape(B, N, F)

    # Lift the Linear so it acts block-diagonally on the flattened (H*C) axis:
    #   y[..., h*C + d] = sum_c t[..., h*C + c] * w2[d, c]  =>  M = I_H (x) W2^T
    m = jnp.kron(jnp.eye(H, dtype=w2.dtype), w2.T).astype(jnp.bfloat16)

    itemsize = jnp.dtype(x_slab.dtype).itemsize
    tb = _pick_batch_tile(B, N, F, itemsize, block_bytes)
    w1b = jnp.broadcast_to(w1.astype(jnp.bfloat16), (tb, N, N))

    flops = 2 * B * N * N * F + 2 * B * N * F * F
    bytes_accessed = 2 * B * N * F * itemsize + F * F * 2 + tb * N * N * 2

    out_slab = pl.pallas_call(
        _gcn_kernel,
        out_shape=jax.ShapeDtypeStruct((B, N, F), x_nchw.dtype),
        grid=(B // tb,),
        in_specs=[
            pl.BlockSpec((tb, N, F), lambda i: (i, 0, 0)),
            pl.BlockSpec((tb, N, N), lambda i: (0, 0, 0)),
            pl.BlockSpec((F, F), lambda i: (0, 0)),
        ],
        out_specs=pl.BlockSpec((tb, N, F), lambda i: (i, 0, 0)),
        compiler_params=pltpu.CompilerParams(
            dimension_semantics=("parallel",),
            vmem_limit_bytes=32 * 1024 * 1024,
        ),
        cost_estimate=pl.CostEstimate(
            flops=flops, transcendentals=0, bytes_accessed=bytes_accessed),
    )(x_slab, w1b, m)

    # Contiguous split -> no data movement.
    return out_slab.reshape(B, N, H, C)


def gcn_reference(x_nchw, w1, w2):
    # Plain-JAX (f32) reference of the PyTorch forward.
    out = jnp.einsum("nm,bmhc->bnhc", w1, x_nchw)
    out = jnp.maximum(out + x_nchw, 0.0)
    return jnp.einsum("bnhc,dc->bnhd", out, w2)


if __name__ == "__main__":
    # Small but lane-dense shapes: batch=2, num_node=8, H=4, num_channel=128.
    B, N, H, C = 2, 8, 4, 128

    key = jax.random.PRNGKey(0)
    kx, k1, k2 = jax.random.split(key, 3)

    x = jax.random.normal(kx, (B, N, H, C), dtype=jnp.float32)
    # Conv2d(num_node, num_node, 1, bias=False) weight -> (N, N)
    w1 = jax.random.normal(k1, (N, N), dtype=jnp.float32) * (1.0 / jnp.sqrt(N))
    # Linear(num_channel, num_channel, bias=False) weight -> (C, C)
    w2 = jax.random.normal(k2, (C, C), dtype=jnp.float32) * (1.0 / jnp.sqrt(C))

    gcn_fn = jax.jit(gcn_forward)
    out = gcn_fn(x, w1, w2)
    out = jax.block_until_ready(out)

    ref = gcn_reference(x, w1, w2)
    assert out.shape == (B, N, H, C), f"bad shape {out.shape}"
    # bf16 matmul inputs with f32 accumulation -> looser tolerance vs f32 ref.
    assert jnp.allclose(out, ref, atol=5e-2, rtol=5e-2), "mismatch vs reference"

    print("KERNEL_OK")
</pallas_src>

<mosaic_0001>
module attributes {stable_mosaic.version = 11 : i64} {
  func.func @_gcn_kernel(%arg0: i32, %arg1: memref<2x8x512xf32, #tpu.memory_space<vmem>>, %arg2: memref<2x8x8xbf16, #tpu.memory_space<vmem>>, %arg3: memref<512x512xbf16, #tpu.memory_space<vmem>>, %arg4: memref<2x8x512xf32, #tpu.memory_space<vmem>>) attributes {dimension_semantics = [#tpu.dimension_semantics<parallel>], iteration_bounds = array<i64: 1>, scalar_prefetch = 0 : i64, scratch_operands = 0 : i64, tpu.core_type = #tpu.core_type<tc>, window_params = [{transform_indices = @transform_0, window_bounds = array<i64: 2, 8, 512>}, {pipeline_mode = #tpu.pipeline_mode<synchronous>, transform_indices = @transform_1, window_bounds = array<i64: 2, 8, 8>}, {pipeline_mode = #tpu.pipeline_mode<synchronous>, transform_indices = @transform_2, window_bounds = array<i64: 512, 512>}, {transform_indices = @transform_3, window_bounds = array<i64: 2, 8, 512>}]} {
    %c0 = arith.constant 0 : index
    %c0_0 = arith.constant 0 : index
    %c0_1 = arith.constant 0 : index
    %0 = vector.load %arg1[%c0, %c0_0, %c0_1] : memref<2x8x512xf32, #tpu.memory_space<vmem>>, vector<2x8x512xf32>
    %1 = arith.truncf %0 : vector<2x8x512xf32> to vector<2x8x512xbf16>
    %c0_2 = arith.constant 0 : index
    %c0_3 = arith.constant 0 : index
    %c0_4 = arith.constant 0 : index
    %2 = vector.load %arg2[%c0_2, %c0_3, %c0_4] : memref<2x8x8xbf16, #tpu.memory_space<vmem>>, vector<2x8x8xbf16>
    "tpu.trace_start"() <{level = 10 : i32, message = "tnm,tmf->tnf"}> : () -> ()
    %cst = arith.constant dense<0.000000e+00> : vector<2x8x512xf32>
    %3 = tpu.matmul %2, %1, %cst {dimension_numbers = #tpu.dot_dimension_numbers<[2], [1], [1], [2], [0, 0, 0, 1, 1, 2], [0], [0]>} : vector<2x8x8xbf16>, vector<2x8x512xbf16>, vector<2x8x512xf32> -> vector<2x8x512xf32>
    "tpu.trace_stop"() : () -> ()
    %4 = arith.addf %3, %0 : vector<2x8x512xf32>
    %cst_5 = arith.constant 0.000000e+00 : f32
    %5 = vector.broadcast %cst_5 : f32 to vector<2x8x512xf32>
    %6 = arith.maximumf %4, %5 : vector<2x8x512xf32>
    %7 = arith.truncf %6 : vector<2x8x512xf32> to vector<2x8x512xbf16>
    %8 = vector.shape_cast %7 : vector<2x8x512xbf16> to vector<16x512xbf16>
    %c0_6 = arith.constant 0 : index
    %c0_7 = arith.constant 0 : index
    %9 = vector.load %arg3[%c0_6, %c0_7] : memref<512x512xbf16, #tpu.memory_space<vmem>>, vector<512x512xbf16>
    %cst_8 = arith.constant dense<0.000000e+00> : vector<16x512xf32>
    %10 = tpu.matmul %8, %9, %cst_8 {dimension_numbers = #tpu.dot_dimension_numbers<[1], [0], [0], [1], [0, 0, 1, 1], [], []>} : vector<16x512xbf16>, vector<512x512xbf16>, vector<16x512xf32> -> vector<16x512xf32>
    %11 = vector.shape_cast %10 : vector<16x512xf32> to vector<2x8x512xf32>
    %c0_9 = arith.constant 0 : index
    %c0_10 = arith.constant 0 : index
    %c0_11 = arith.constant 0 : index
    %12 = vector.load %arg4[%c0_9, %c0_10, %c0_11] : memref<2x8x512xf32, #tpu.memory_space<vmem>>, vector<2x8x512xf32>
    tpu.vector_store %arg4[%c0_9, %c0_10, %c0_11], %11 {strides = array<i32>} : memref<2x8x512xf32, #tpu.memory_space<vmem>>, vector<2x8x512xf32>,
    return
  }
  func.func @transform_0(%arg0: i32) -> (i32, i32, i32) {
    %c0_i32 = arith.constant 0 : i32
    %c0_i32_0 = arith.constant 0 : i32
    %c0_i32_1 = arith.constant 0 : i32
    return %arg0, %c0_i32, %c0_i32_0 : i32, i32, i32
  }
  func.func @transform_1(%arg0: i32) -> (i32, i32, i32) {
    %c0_i32 = arith.constant 0 : i32
    %c0_i32_0 = arith.constant 0 : i32
    %c0_i32_1 = arith.constant 0 : i32
    %c0_i32_2 = arith.constant 0 : i32
    return %c0_i32, %c0_i32_0, %c0_i32_1 : i32, i32, i32
  }
  func.func @transform_2(%arg0: i32) -> (i32, i32) {
    %c0_i32 = arith.constant 0 : i32
    %c0_i32_0 = arith.constant 0 : i32
    %c0_i32_1 = arith.constant 0 : i32
    return %c0_i32, %c0_i32_0 : i32, i32
  }
  func.func @transform_3(%arg0: i32) -> (i32, i32, i32) {
    %c0_i32 = arith.constant 0 : i32
    %c0_i32_0 = arith.constant 0 : i32
    %c0_i32_1 = arith.constant 0 : i32
    return %arg0, %c0_i32, %c0_i32_0 : i32, i32, i32
  }
}

</mosaic_0001>

<llo_original>
// kernel: gcn_forward.1
$region0: #{gcn_forward.1}
  #allocation0 [shape = 'u32[]', space=smem, size = 0x4, offset = 0x4, fixed_abs, tag = 'smem constant byte address 0x4 - core index']
  #allocation1 [shape = 'u32[144,128]{1,0:T(1,128)}', space=vmem, size = 0x12000, scoped, tag = 'internal scratch']
  %s0 = inlined_call_operand.vmem [shape: f32[2,8,512], index: 0, kind: input, shape index: {}]
  %s1 = inlined_call_operand.vmem [shape: bf16[2,8,8], index: 1, kind: input, shape index: {}]
  %s2 = inlined_call_operand.vmem [shape: bf16[512,512], index: 2, kind: input, shape index: {}]
  %s3 = inlined_call_operand.vmem [shape: f32[2,8,512], index: 3, kind: output, shape index: {}]
  %s4 = sld [smem:[#allocation0]]
  $region22: #{gcn_forward.1} parent=0
    _
  %s6 = ssub.s32 1, %s4
  %s7 = scalar_select 0, %s6, %s4
  // Predicated region
  $region2: #{gcn_forward.1} parent=0 // pred_check
    _
  $region3: #{gcn_forward.1} parent=0 // pred_check_branch
    %9 = sbr.rel (0) target = $region5
  $region4: #{gcn_forward.1} parent=0 // pred_region
    _
  $region5: #{gcn_forward.1} parent=0 // pred_fallthru
    _
  // Predicated region
  $region6: #{gcn_forward.1} parent=0 // pred_check
    _
  $region7: #{gcn_forward.1} parent=0 // pred_check_branch
    %11 = sbr.rel (0) target = $region9
  $region8: #{gcn_forward.1} parent=0 // pred_region
    _
  $region9: #{gcn_forward.1} parent=0 // pred_fallthru
    _
  // Predicated region
  $region10: #{gcn_forward.1} parent=0 // pred_check
    _
  $region11: #{gcn_forward.1} parent=0 // pred_check_branch
    %13 = sbr.rel (0) target = $region13
  $region12: #{gcn_forward.1} parent=0 // pred_region
    _
  $region13: #{gcn_forward.1} parent=0 // pred_fallthru
    _
  %v15 = vld [vmem:[%s0] sm:$0xff]
  %v16 = vld [vmem:[%s0 + $0x8] sm:$0xff]
  %v17 = vld [vmem:[%s0 + $0x10] sm:$0xff]
  %v18 = vld [vmem:[%s0 + $0x18] sm:$0xff]
  %v19 = vld [vmem:[%s0 + $0x20] sm:$0xff]
  %v20 = vld [vmem:[%s0 + $0x28] sm:$0xff]
  %v21 = vld [vmem:[%s0 + $0x30] sm:$0xff]
  %v22 = vld [vmem:[%s0 + $0x38] sm:$0xff]
  %v23 = vpack.c.bf16 %v15, %v15
  %v24 = vpack.c.bf16 %v16, %v16
  %v25 = vpack.c.bf16 %v17, %v17
  %v26 = vpack.c.bf16 %v18, %v18
  %v27 = vpack.c.bf16 %v19, %v19
  %v28 = vpack.c.bf16 %v20, %v20
  %v29 = vpack.c.bf16 %v21, %v21
  %v30 = vpack.c.bf16 %v22, %v22
  %v31 = vld [vmem:[%s1] sm:$0xf]
  %v32 = vld [vmem:[%s1 + $0x4] sm:$0xf]
  %vm33 = vcmask 64512
  %v35 = vsel %vm33, %v31, 0
  %vm37 = vcmask 1043456
  %v39 = vsel %vm37, %v23, 0
  %v42 = vsel %vm37, %v24, 0
  %v45 = vsel %vm37, %v25, 0
  %v48 = vsel %vm37, %v26, 0
  %50 = vmatprep.subr.bf16.mxu0 %v42
  %51 = vmatpush1.bf16.msra.mxu0 %v39
  %52 = vmatprep.subr.bf16.mxu0 0
  %53 = vmatpush1.bf16.msra.mxu0 0
  %54 = vmatprep.subr.bf16.mxu0 0
  %55 = vmatpush1.bf16.msra.mxu0 0
  %56 = vmatprep.subr.bf16.mxu0 0
  %57 = vmatpush1.bf16.msra.mxu0 0
  %58 = vmatprep.subr.bf16.mxu0 0
  %59 = vmatpush1.bf16.msra.mxu0 0
  %60 = vmatprep.subr.bf16.mxu0 0
  %61 = vmatpush1.bf16.msra.mxu0 0
  %62 = vmatprep.subr.bf16.mxu0 0
  %63 = vmatpush1.bf16.msra.mxu0 0
  %64 = vmatprep.subr.bf16.mxu0 0
  %65 = vmatpush1.bf16.msra.mxu0 0
  %66 = vmatprep.subr.bf16.mxu0 0
  %67 = vmatpush1.bf16.msra.mxu0 0
  %68 = vmatprep.subr.bf16.mxu0 0
  %69 = vmatpush1.bf16.msra.mxu0 0
  %70 = vmatprep.subr.bf16.mxu0 0
  %71 = vmatpush1.bf16.msra.mxu0 0
  %72 = vmatprep.subr.bf16.mxu0 0
  %73 = vmatpush1.bf16.msra.mxu0 0
  %74 = vmatprep.subr.bf16.mxu0 0
  %75 = vmatpush1.bf16.msra.mxu0 0
  %76 = vmatprep.subr.bf16.mxu0 0
  %77 = vmatpush1.bf16.msra.mxu0 0
  %78 = vmatprep.subr.bf16.mxu0 0
  %79 = vmatpush1.bf16.msra.mxu0 0
  %80 = vmatprep.subr.bf16.mxu0 0
  %81 = vmatpush1.bf16.msra.mxu0 0
  %82 = vmatprep.mubr.bf16.mxu0 0
  %83 = vmatmul.mubr.bf16.gmra.mrb[0].mxu0 %v35
  %v84 = vpop.f32.mrb[0].mxu0
  %v85 = vadd.f32 %v15, %v84
  %v86 = vpop.f32.mrb[0].mxu0
  %v87 = vadd.f32 %v16, %v86
  %v88 = vpop.f32.mrb[0].mxu0
  %v89 = vpop.f32.mrb[0].mxu0
  %90 = vdwg.mxu0
  %91 = vmatprep.subr.bf16.mxu0 %v48
  %92 = vmatpush1.bf16.msra.mxu0 %v45
  %93 = vmatprep.subr.bf16.mxu0 0
  %94 = vmatpush1.bf16.msra.mxu0 0
  %95 = vmatprep.subr.bf16.mxu0 0
  %96 = vmatpush1.bf16.msra.mxu0 0
  %97 = vmatprep.subr.bf16.mxu0 0
  %98 = vmatpush1.bf16.msra.mxu0 0
  %99 = vmatprep.subr.bf16.mxu0 0
  %100 = vmatpush1.bf16.msra.mxu0 0
  %101 = vmatprep.subr.bf16.mxu0 0
  %102 = vmatpush1.bf16.msra.mxu0 0
  %103 = vmatprep.subr.bf16.mxu0 0
  %104 = vmatpush1.bf16.msra.mxu0 0
  %105 = vmatprep.subr.bf16.mxu0 0
  %106 = vmatpush1.bf16.msra.mxu0 0
  %107 = vmatprep.subr.bf16.mxu0 0
  %108 = vmatpush1.bf16.msra.mxu0 0
  %109 = vmatprep.subr.bf16.mxu0 0
  %110 = vmatpush1.bf16.msra.mxu0 0
  %111 = vmatprep.subr.bf16.mxu0 0
  %112 = vmatpush1.bf16.msra.mxu0 0
  %113 = vmatprep.subr.bf16.mxu0 0
  %114 = vmatpush1.bf16.msra.mxu0 0
  %115 = vmatprep.subr.bf16.mxu0 0
  %116 = vmatpush1.bf16.msra.mxu0 0
  %117 = vmatprep.subr.bf16.mxu0 0
  %118 = vmatpush1.bf16.msra.mxu0 0
  %119 = vmatprep.subr.bf16.mxu0 0
  %120 = vmatpush1.bf16.msra.mxu0 0
  %121 = vmatprep.subr.bf16.mxu0 0
  %122 = vmatpush1.bf16.msra.mxu0 0
  %123 = vmatprep.mubr.bf16.mxu0 0
  %124 = vmatmul.mubr.bf16.gmra.mrb[0].mxu0 %v35
  %v125 = vpop.f32.mrb[0].mxu0
  %v126 = vadd.f32 %v17, %v125
  %v127 = vpop.f32.mrb[0].mxu0
  %v128 = vadd.f32 %v18, %v127
  %v129 = vpop.f32.mrb[0].mxu0
  %v130 = vpop.f32.mrb[0].mxu0
  %131 = vdwg.mxu0
  %v133 = vsel %vm33, %v32, 0
  %v136 = vsel %vm37, %v27, 0
  %v139 = vsel %vm37, %v28, 0
  %v142 = vsel %vm37, %v29, 0
  %v145 = vsel %vm37, %v30, 0
  %147 = vmatprep.subr.bf16.mxu0 %v139
  %148 = vmatpush1.bf16.msra.mxu0 %v136
  %149 = vmatprep.subr.bf16.mxu0 0
  %150 = vmatpush1.bf16.msra.mxu0 0
  %151 = vmatprep.subr.bf16.mxu0 0
  %152 = vmatpush1.bf16.msra.mxu0 0
  %153 = vmatprep.subr.bf16.mxu0 0
  %154 = vmatpush1.bf16.msra.mxu0 0
  %155 = vmatprep.subr.bf16.mxu0 0
  %156 = vmatpush1.bf16.msra.mxu0 0
  %157 = vmatprep.subr.bf16.mxu0 0
  %158 = vmatpush1.bf16.msra.mxu0 0
  %159 = vmatprep.subr.bf16.mxu0 0
  %160 = vmatpush1.bf16.msra.mxu0 0
  %161 = vmatprep.subr.bf16.mxu0 0
  %162 = vmatpush1.bf16.msra.mxu0 0
  %163 = vmatprep.subr.bf16.mxu0 0
  %164 = vmatpush1.bf16.msra.mxu0 0
  %165 = vmatprep.subr.bf16.mxu0 0
  %166 = vmatpush1.bf16.msra.mxu0 0
  %167 = vmatprep.subr.bf16.mxu0 0
  %168 = vmatpush1.bf16.msra.mxu0 0
  %169 = vmatprep.subr.bf16.mxu0 0
  %170 = vmatpush1.bf16.msra.mxu0 0
  %171 = vmatprep.subr.bf16.mxu0 0
  %172 = vmatpush1.bf16.msra.mxu0 0
  %173 = vmatprep.subr.bf16.mxu0 0
  %174 = vmatpush1.bf16.msra.mxu0 0
  %175 = vmatprep.subr.bf16.mxu0 0
  %176 = vmatpush1.bf16.msra.mxu0 0
  %177 = vmatprep.subr.bf16.mxu0 0
  %178 = vmatpush1.bf16.msra.mxu0 0
  %179 = vmatprep.mubr.bf16.mxu0 0
  %180 = vmatmul.mubr.bf16.gmra.mrb[0].mxu0 %v133
  %v181 = vpop.f32.mrb[0].mxu0
  %v182 = vadd.f32 %v19, %v181
  %v183 = vpop.f32.mrb[0].mxu0
  %v184 = vadd.f32 %v20, %v183
  %v185 = vpop.f32.mrb[0].mxu0
  %v186 = vpop.f32.mrb[0].mxu0
  %187 = vdwg.mxu0
  %188 = vmatprep.subr.bf16.mxu0 %v145
  %189 = vmatpush1.bf16.msra.mxu0 %v142
  %190 = vmatprep.subr.bf16.mxu0 0
  %191 = vmatpush1.bf16.msra.mxu0 0
  %192 = vmatprep.subr.bf16.mxu0 0
  %193 = vmatpush1.bf16.msra.mxu0 0
  %194 = vmatprep.subr.bf16.mxu0 0
  %195 = vmatpush1.bf16.msra.mxu0 0
  %196 = vmatprep.subr.bf16.mxu0 0
  %197 = vmatpush1.bf16.msra.mxu0 0
  %198 = vmatprep.subr.bf16.mxu0 0
  %199 = vmatpush1.bf16.msra.mxu0 0
  %200 = vmatprep.subr.bf16.mxu0 0
  %201 = vmatpush1.bf16.msra.mxu0 0
  %202 = vmatprep.subr.bf16.mxu0 0
  %203 = vmatpush1.bf16.msra.mxu0 0
  %204 = vmatprep.subr.bf16.mxu0 0
  %205 = vmatpush1.bf16.msra.mxu0 0
  %206 = vmatprep.subr.bf16.mxu0 0
  %207 = vmatpush1.bf16.msra.mxu0 0
  %208 = vmatprep.subr.bf16.mxu0 0
  %209 = vmatpush1.bf16.msra.mxu0 0
  %210 = vmatprep.subr.bf16.mxu0 0
  %211 = vmatpush1.bf16.msra.mxu0 0
  %212 = vmatprep.subr.bf16.mxu0 0
  %213 = vmatpush1.bf16.msra.mxu0 0
  %214 = vmatprep.subr.bf16.mxu0 0
  %215 = vmatpush1.bf16.msra.mxu0 0
  %216 = vmatprep.subr.bf16.mxu0 0
  %217 = vmatpush1.bf16.msra.mxu0 0
  %218 = vmatprep.subr.bf16.mxu0 0
  %219 = vmatpush1.bf16.msra.mxu0 0
  %220 = vmatprep.mubr.bf16.mxu0 0
  %221 = vmatmul.mubr.bf16.gmra.mrb[0].mxu0 %v133
  %v222 = vpop.f32.mrb[0].mxu0
  %v223 = vadd.f32 %v21, %v222
  %v224 = vpop.f32.mrb[0].mxu0
  %v225 = vadd.f32 %v22, %v224
  %v226 = vpop.f32.mrb[0].mxu0
  %v227 = vpop.f32.mrb[0].mxu0
  %228 = vdwg.mxu0
  %v229 = vmax.f32 %v85, 0.0
  %v230 = vmax.f32 %v87, 0.0
  %v231 = vmax.f32 %v126, 0.0
  %v232 = vmax.f32 %v128, 0.0
  %v233 = vmax.f32 %v182, 0.0
  %v234 = vmax.f32 %v184, 0.0
  %v235 = vmax.f32 %v223, 0.0
  %v236 = vmax.f32 %v225, 0.0
  %v237 = vpack.c.bf16 %v229, %v229
  %v238 = vpack.c.bf16 %v230, %v230
  %v239 = vpack.c.bf16 %v231, %v231
  %v240 = vpack.c.bf16 %v232, %v232
  %v241 = vpack.c.bf16 %v233, %v233
  %v242 = vpack.c.bf16 %v234, %v234
  %v243 = vpack.c.bf16 %v235, %v235
  %v244 = vpack.c.bf16 %v236, %v236
  %v253 = vunpack.c.l.b16 %v237
  %v254 = vunpack.c.l.b16 %v238
  %v255 = vunpack.c.l.b16 %v239
  %v256 = vunpack.c.l.b16 %v240
  %v257 = vunpack.c.l.b16 %v241
  %v258 = vunpack.c.l.b16 %v242
  %v259 = vunpack.c.l.b16 %v243
  %v260 = vunpack.c.l.b16 %v244
  %v261 = vld [vmem:[%s2] sm:$0xff]
  %v262 = vld [vmem:[%s2 + $0x8] sm:$0xff]
  %v263 = vld [vmem:[%s2 + $0x10] sm:$0xff]
  %v264 = vld [vmem:[%s2 + $0x18] sm:$0xff]
  %v265 = vld [vmem:[%s2 + $0x20] sm:$0xff]
  %v266 = vld [vmem:[%s2 + $0x28] sm:$0xff]
  %v267 = vld [vmem:[%s2 + $0x30] sm:$0xff]
  %v268 = vld [vmem:[%s2 + $0x38] sm:$0xff]
  %v269 = vld [vmem:[%s2 + $0x40] sm:$0xff]
  %v270 = vld [vmem:[%s2 + $0x48] sm:$0xff]
  %v271 = vld [vmem:[%s2 + $0x50] sm:$0xff]
  %v272 = vld [vmem:[%s2 + $0x58] sm:$0xff]
  %v273 = vld [vmem:[%s2 + $0x60] sm:$0xff]
  %v274 = vld [vmem:[%s2 + $0x68] sm:$0xff]
  %v275 = vld [vmem:[%s2 + $0x70] sm:$0xff]
  %v276 = vld [vmem:[%s2 + $0x78] sm:$0xff]
  %v277 = vld [vmem:[%s2 + $0x80] sm:$0xff]
  %v278 = vld [vmem:[%s2 + $0x88] sm:$0xff]
  %v279 = vld [vmem:[%s2 + $0x90] sm:$0xff]
  %v280 = vld [vmem:[%s2 + $0x98] sm:$0xff]
  %v281 = vld [vmem:[%s2 + $0xa0] sm:$0xff]
  %v282 = vld [vmem:[%s2 + $0xa8] sm:$0xff]
  %v283 = vld [vmem:[%s2 + $0xb0] sm:$0xff]
  %v284 = vld [vmem:[%s2 + $0xb8] sm:$0xff]
  %v285 = vld [vmem:[%s2 + $0xc0] sm:$0xff]
  %v286 = vld [vmem:[%s2 + $0xc8] sm:$0xff]
  %v287 = vld [vmem:[%s2 + $0xd0] sm:$0xff]
  %v288 = vld [vmem:[%s2 + $0xd8] sm:$0xff]
  %v289 = vld [vmem:[%s2 + $0xe0] sm:$0xff]
  %v290 = vld [vmem:[%s2 + $0xe8] sm:$0xff]
  %v291 = vld [vmem:[%s2 + $0xf0] sm:$0xff]
  %v292 = vld [vmem:[%s2 + $0xf8] sm:$0xff]
  %v293 = vld [vmem:[%s2 + $0x100] sm:$0xff]
  %v294 = vld [vmem:[%s2 + $0x108] sm:$0xff]
  %v295 = vld [vmem:[%s2 + $0x110] sm:$0xff]
  %v296 = vld [vmem:[%s2 + $0x118] sm:$0xff]
  %v297 = vld [vmem:[%s2 + $0x120] sm:$0xff]
  %v298 = vld [vmem:[%s2 + $0x128] sm:$0xff]
  %v299 = vld [vmem:[%s2 + $0x130] sm:$0xff]
  %v300 = vld [vmem:[%s2 + $0x138] sm:$0xff]
  %v301 = vld [vmem:[%s2 + $0x140] sm:$0xff]
  %v302 = vld [vmem:[%s2 + $0x148] sm:$0xff]
  %v303 = vld [vmem:[%s2 + $0x150] sm:$0xff]
  %v304 = vld [vmem:[%s2 + $0x158] sm:$0xff]
  %v305 = vld [vmem:[%s2 + $0x160] sm:$0xff]
  %v306 = vld [vmem:[%s2 + $0x168] sm:$0xff]
  %v307 = vld [vmem:[%s2 + $0x170] sm:$0xff]
  %v308 = vld [vmem:[%s2 + $0x178] sm:$0xff]
  %v309 = vld [vmem:[%s2 + $0x180] sm:$0xff]
  %v310 = vld [vmem:[%s2 + $0x188] sm:$0xff]
  %v311 = vld [vmem:[%s2 + $0x190] sm:$0xff]
  %v312 = vld [vmem:[%s2 + $0x198] sm:$0xff]
  %v313 = vld [vmem:[%s2 + $0x1a0] sm:$0xff]
  %v314 = vld [vmem:[%s2 + $0x1a8] sm:$0xff]
  %v315 = vld [vmem:[%s2 + $0x1b0] sm:$0xff]
  %v316 = vld [vmem:[%s2 + $0x1b8] sm:$0xff]
  %v317 = vld [vmem:[%s2 + $0x1c0] sm:$0xff]
  %v318 = vld [vmem:[%s2 + $0x1c8] sm:$0xff]
  %v319 = vld [vmem:[%s2 + $0x1d0] sm:$0xff]
  %v320 = vld [vmem:[%s2 + $0x1d8] sm:$0xff]
  %v321 = vld [vmem:[%s2 + $0x1e0] sm:$0xff]
  %v322 = vld [vmem:[%s2 + $0x1e8] sm:$0xff]
  %v323 = vld [vmem:[%s2 + $0x1f0] sm:$0xff]
  %v324 = vld [vmem:[%s2 + $0x1f8] sm:$0xff]
  %v325 = vld [vmem:[%s2 + $0x200] sm:$0xff]
  %v326 = vld [vmem:[%s2 + $0x208] sm:$0xff]
  %v327 = vld [vmem:[%s2 + $0x210] sm:$0xff]
  %v328 = vld [vmem:[%s2 + $0x218] sm:$0xff]
  %v329 = vld [vmem:[%s2 + $0x220] sm:$0xff]
  %v330 = vld [vmem:[%s2 + $0x228] sm:$0xff]
  %v331 = vld [vmem:[%s2 + $0x230] sm:$0xff]
  %v332 = vld [vmem:[%s2 + $0x238] sm:$0xff]
  %v333 = vld [vmem:[%s2 + $0x240] sm:$0xff]
  %v334 = vld [vmem:[%s2 + $0x248] sm:$0xff]
  %v335 = vld [vmem:[%s2 + $0x250] sm:$0xff]
  %v336 = vld [vmem:[%s2 + $0x258] sm:$0xff]
  %v337 = vld [vmem:[%s2 + $0x260] sm:$0xff]
  %v338 = vld [vmem:[%s2 + $0x268] sm:$0xff]
  %v339 = vld [vmem:[%s2 + $0x270] sm:$0xff]
  %v340 = vld [vmem:[%s2 + $0x278] sm:$0xff]
  %v341 = vld [vmem:[%s2 + $0x280] sm:$0xff]
  %v342 = vld [vmem:[%s2 + $0x288] sm:$0xff]
  %v343 = vld [vmem:[%s2 + $0x290] sm:$0xff]
  %v344 = vld [vmem:[%s2 + $0x298] sm:$0xff]
  %v345 = vld [vmem:[%s2 + $0x2a0] sm:$0xff]
  %v346 = vld [vmem:[%s2 + $0x2a8] sm:$0xff]
  %v347 = vld [vmem:[%s2 + $0x2b0] sm:$0xff]
  %v348 = vld [vmem:[%s2 + $0x2b8] sm:$0xff]
  %v349 = vld [vmem:[%s2 + $0x2c0] sm:$0xff]
  %v350 = vld [vmem:[%s2 + $0x2c8] sm:$0xff]
  %v351 = vld [vmem:[%s2 + $0x2d0] sm:$0xff]
  %v352 = vld [vmem:[%s2 + $0x2d8] sm:$0xff]
  %v353 = vld [vmem:[%s2 + $0x2e0] sm:$0xff]
  %v354 = vld [vmem:[%s2 + $0x2e8] sm:$0xff]
  %v355 = vld [vmem:[%s2 + $0x2f0] sm:$0xff]
  %v356 = vld [vmem:[%s2 + $0x2f8] sm:$0xff]
  %v357 = vld [vmem:[%s2 + $0x300] sm:$0xff]
  %v358 = vld [vmem:[%s2 + $0x308] sm:$0xff]
  %v359 = vld [vmem:[%s2 + $0x310] sm:$0xff]
  %v360 = vld [vmem:[%s2 + $0x318] sm:$0xff]
  %v361 = vld [vmem:[%s2 + $0x320] sm:$0xff]
  %v362 = vld [vmem:[%s2 + $0x328] sm:$0xff]
  %v363 = vld [vmem:[%s2 + $0x330] sm:$0xff]
  %v364 = vld [vmem:[%s2 + $0x338] sm:$0xff]
  %v365 = vld [vmem:[%s2 + $0x340] sm:$0xff]
  %v366 = vld [vmem:[%s2 + $0x348] sm:$0xff]
  %v367 = vld [vmem:[%s2 + $0x350] sm:$0xff]
  %v368 = vld [vmem:[%s2 + $0x358] sm:$0xff]
  %v369 = vld [vmem:[%s2 + $0x360] sm:$0xff]
  %v370 = vld [vmem:[%s2 + $0x368] sm:$0xff]
  %v371 = vld [vmem:[%s2 + $0x370] sm:$0xff]
  %v372 = vld [vmem:[%s2 + $0x378] sm:$0xff]
  %v373 = vld [vmem:[%s2 + $0x380] sm:$0xff]
  %v374 = vld [vmem:[%s2 + $0x388] sm:$0xff]
  %v375 = vld [vmem:[%s2 + $0x390] sm:$0xff]
  %v376 = vld [vmem:[%s2 + $0x398] sm:$0xff]
  %v377 = vld [vmem:[%s2 + $0x3a0] sm:$0xff]
  %v378 = vld [vmem:[%s2 + $0x3a8] sm:$0xff]
  %v379 = vld [vmem:[%s2 + $0x3b0] sm:$0xff]
  %v380 = vld [vmem:[%s2 + $0x3b8] sm:$0xff]
  %v381 = vld [vmem:[%s2 + $0x3c0] sm:$0xff]
  %v382 = vld [vmem:[%s2 + $0x3c8] sm:$0xff]
  %v383 = vld [vmem:[%s2 + $0x3d0] sm:$0xff]
  %v384 = vld [vmem:[%s2 + $0x3d8] sm:$0xff]
  %v385 = vld [vmem:[%s2 + $0x3e0] sm:$0xff]
  %v386 = vld [vmem:[%s2 + $0x3e8] sm:$0xff]
  %v387 = vld [vmem:[%s2 + $0x3f0] sm:$0xff]
  %v388 = vld [vmem:[%s2 + $0x3f8] sm:$0xff]
  %v389 = vpack.c.b16 %v257, %v253
  %v390 = vpack.c.b16 %v258, %v254
  %v391 = vpack.c.b16 %v259, %v255
  %v392 = vpack.c.b16 %v260, %v256
  %v525 = vunpack.c.l.b16 %v261
  %v526 = vunpack.c.h.b16 %v261
  %v527 = vunpack.c.l.b16 %v262
  %v528 = vunpack.c.h.b16 %v262
  %v529 = vunpack.c.l.b16 %v263
  %v530 = vunpack.c.h.b16 %v263
  %v531 = vunpack.c.l.b16 %v264
  %v532 = vunpack.c.h.b16 %v264
  %v533 = vunpack.c.l.b16 %v265
  %v534 = vunpack.c.h.b16 %v265
  %v535 = vunpack.c.l.b16 %v266
  %v536 = vunpack.c.h.b16 %v266
  %v537 = vunpack.c.l.b16 %v267
  %v538 = vunpack.c.h.b16 %v267
  %v539 = vunpack.c.l.b16 %v268
  %v540 = vunpack.c.h.b16 %v268
  %v541 = vunpack.c.l.b16 %v269
  %v542 = vunpack.c.h.b16 %v269
  %v543 = vunpack.c.l.b16 %v270
  %v544 = vunpack.c.h.b16 %v270
  %v545 = vunpack.c.l.b16 %v271
  %v546 = vunpack.c.h.b16 %v271
  %v547 = vunpack.c.l.b16 %v272
  %v548 = vunpack.c.h.b16 %v272
  %v549 = vunpack.c.l.b16 %v273
  %v550 = vunpack.c.h.b16 %v273
  %v551 = vunpack.c.l.b16 %v274
  %v552 = vunpack.c.h.b16 %v274
  %v553 = vunpack.c.l.b16 %v275
  %v554 = vunpack.c.h.b16 %v275
  %v555 = vunpack.c.l.b16 %v276
  %v556 = vunpack.c.h.b16 %v276
  %v557 = vunpack.c.l.b16 %v277
  %v558 = vunpack.c.h.b16 %v277
  %v559 = vunpack.c.l.b16 %v278
  %v560 = vunpack.c.h.b16 %v278
  %v561 = vunpack.c.l.b16 %v279
  %v562 = vunpack.c.h.b16 %v279
  %v563 = vunpack.c.l.b16 %v280
  %v564 = vunpack.c.h.b16 %v280
  %v565 = vunpack.c.l.b16 %v281
  %v566 = vunpack.c.h.b16 %v281
  %v567 = vunpack.c.l.b16 %v282
  %v568 = vunpack.c.h.b16 %v282
  %v569 = vunpack.c.l.b16 %v283
  %v570 = vunpack.c.h.b16 %v283
  %v571 = vunpack.c.l.b16 %v284
  %v572 = vunpack.c.h.b16 %v284
  %v573 = vunpack.c.l.b16 %v285
  %v574 = vunpack.c.h.b16 %v285
  %v575 = vunpack.c.l.b16 %v286
  %v576 = vunpack.c.h.b16 %v286
  %v577 = vunpack.c.l.b16 %v287
  %v578 = vunpack.c.h.b16 %v287
  %v579 = vunpack.c.l.b16 %v288
  %v580 = vunpack.c.h.b16 %v288
  %v581 = vunpack.c.l.b16 %v289
  %v582 = vunpack.c.h.b16 %v289
  %v583 = vunpack.c.l.b16 %v290
  %v584 = vunpack.c.h.b16 %v290
  %v585 = vunpack.c.l.b16 %v291
  %v586 = vunpack.c.h.b16 %v291
  %v587 = vunpack.c.l.b16 %v292
  %v588 = vunpack.c.h.b16 %v292
  %v589 = vunpack.c.l.b16 %v293
  %v590 = vunpack.c.h.b16 %v293
  %v591 = vunpack.c.l.b16 %v294
  %v592 = vunpack.c.h.b16 %v294
  %v593 = vunpack.c.l.b16 %v295
  %v594 = vunpack.c.h.b16 %v295
  %v595 = vunpack.c.l.b16 %v296
  %v596 = vunpack.c.h.b16 %v296
  %v597 = vunpack.c.l.b16 %v297
  %v598 = vunpack.c.h.b16 %v297
  %v599 = vunpack.c.l.b16 %v298
  %v600 = vunpack.c.h.b16 %v298
  %v601 = vunpack.c.l.b16 %v299
  %v602 = vunpack.c.h.b16 %v299
  %v603 = vunpack.c.l.b16 %v300
  %v604 = vunpack.c.h.b16 %v300
  %v605 = vunpack.c.l.b16 %v301
  %v606 = vunpack.c.h.b16 %v301
  %v607 = vunpack.c.l.b16 %v302
  %v608 = vunpack.c.h.b16 %v302
  %v609 = vunpack.c.l.b16 %v303
  %v610 = vunpack.c.h.b16 %v303
  %v611 = vunpack.c.l.b16 %v304
  %v612 = vunpack.c.h.b16 %v304
  %v613 = vunpack.c.l.b16 %v305
  %v614 = vunpack.c.h.b16 %v305
  %v615 = vunpack.c.l.b16 %v306
  %v616 = vunpack.c.h.b16 %v306
  %v617 = vunpack.c.l.b16 %v307
  %v618 = vunpack.c.h.b16 %v307
  %v619 = vunpack.c.l.b16 %v308
  %v620 = vunpack.c.h.b16 %v308
  %v621 = vunpack.c.l.b16 %v309
  %v622 = vunpack.c.h.b16 %v309
  %v623 = vunpack.c.l.b16 %v310
  %v624 = vunpack.c.h.b16 %v310
  %v625 = vunpack.c.l.b16 %v311
  %v626 = vunpack.c.h.b16 %v311
  %v627 = vunpack.c.l.b16 %v312
  %v628 = vunpack.c.h.b16 %v312
  %v629 = vunpack.c.l.b16 %v313
  %v630 = vunpack.c.h.b16 %v313
  %v631 = vunpack.c.l.b16 %v314
  %v632 = vunpack.c.h.b16 %v314
  %v633 = vunpack.c.l.b16 %v315
  %v634 = vunpack.c.h.b16 %v315
  %v635 = vunpack.c.l.b16 %v316
  %v636 = vunpack.c.h.b16 %v316
  %v637 = vunpack.c.l.b16 %v317
  %v638 = vunpack.c.h.b16 %v317
  %v639 = vunpack.c.l.b16 %v318
  %v640 = vunpack.c.h.b16 %v318
  %v641 = vunpack.c.l.b16 %v319
  %v642 = vunpack.c.h.b16 %v319
  %v643 = vunpack.c.l.b16 %v320
  %v644 = vunpack.c.h.b16 %v320
  %v645 = vunpack.c.l.b16 %v321
  %v646 = vunpack.c.h.b16 %v321
  %v647 = vunpack.c.l.b16 %v322
  %v648 = vunpack.c.h.b16 %v322
  %v649 = vunpack.c.l.b16 %v323
  %v650 = vunpack.c.h.b16 %v323
  %v651 = vunpack.c.l.b16 %v324
  %v652 = vunpack.c.h.b16 %v324
  %v653 = vunpack.c.l.b16 %v325
  %v654 = vunpack.c.h.b16 %v325
  %v655 = vunpack.c.l.b16 %v326
  %v656 = vunpack.c.h.b16 %v326
  %v657 = vunpack.c.l.b16 %v327
  %v658 = vunpack.c.h.b16 %v327
  %v659 = vunpack.c.l.b16 %v328
  %v660 = vunpack.c.h.b16 %v328
  %v661 = vunpack.c.l.b16 %v329
  %v662 = vunpack.c.h.b16 %v329
  %v663 = vunpack.c.l.b16 %v330
  %v664 = vunpack.c.h.b16 %v330
  %v665 = vunpack.c.l.b16 %v331
  %v666 = vunpack.c.h.b16 %v331
  %v667 = vunpack.c.l.b16 %v332
  %v668 = vunpack.c.h.b16 %v332
  %v669 = vunpack.c.l.b16 %v333
  %v670 = vunpack.c.h.b16 %v333
  %v671 = vunpack.c.l.b16 %v334
  %v672 = vunpack.c.h.b16 %v334
  %v673 = vunpack.c.l.b16 %v335
  %v674 = vunpack.c.h.b16 %v335
  %v675 = vunpack.c.l.b16 %v336
  %v676 = vunpack.c.h.b16 %v336
  %v677 = vunpack.c.l.b16 %v337
  %v678 = vunpack.c.h.b16 %v337
  %v679 = vunpack.c.l.b16 %v338
  %v680 = vunpack.c.h.b16 %v338
  %v681 = vunpack.c.l.b16 %v339
  %v682 = vunpack.c.h.b16 %v339
  %v683 = vunpack.c.l.b16 %v340
  %v684 = vunpack.c.h.b16 %v340
  %v685 = vunpack.c.l.b16 %v341
  %v686 = vunpack.c.h.b16 %v341
  %v687 = vunpack.c.l.b16 %v342
  %v688 = vunpack.c.h.b16 %v342
  %v689 = vunpack.c.l.b16 %v343
  %v690 = vunpack.c.h.b16 %v343
  %v691 = vunpack.c.l.b16 %v344
  %v692 = vunpack.c.h.b16 %v344
  %v693 = vunpack.c.l.b16 %v345
  %v694 = vunpack.c.h.b16 %v345
  %v695 = vunpack.c.l.b16 %v346
  %v696 = vunpack.c.h.b16 %v346
  %v697 = vunpack.c.l.b16 %v347
  %v698 = vunpack.c.h.b16 %v347
  %v699 = vunpack.c.l.b16 %v348
  %v700 = vunpack.c.h.b16 %v348
  %v701 = vunpack.c.l.b16 %v349
  %v702 = vunpack.c.h.b16 %v349
  %v703 = vunpack.c.l.b16 %v350
  %v704 = vunpack.c.h.b16 %v350
  %v705 = vunpack.c.l.b16 %v351
  %v706 = vunpack.c.h.b16 %v351
  %v707 = vunpack.c.l.b16 %v352
  %v708 = vunpack.c.h.b16 %v352
  %v709 = vunpack.c.l.b16 %v353
  %v710 = vunpack.c.h.b16 %v353
  %v711 = vunpack.c.l.b16 %v354
  %v712 = vunpack.c.h.b16 %v354
  %v713 = vunpack.c.l.b16 %v355
  %v714 = vunpack.c.h.b16 %v355
  %v715 = vunpack.c.l.b16 %v356
  %v716 = vunpack.c.h.b16 %v356
  %v717 = vunpack.c.l.b16 %v357
  %v718 = vunpack.c.h.b16 %v357
  %v719 = vunpack.c.l.b16 %v358
  %v720 = vunpack.c.h.b16 %v358
  %v721 = vunpack.c.l.b16 %v359
  %v722 = vunpack.c.h.b16 %v359
  %v723 = vunpack.c.l.b16 %v360
  %v724 = vunpack.c.h.b16 %v360
  %v725 = vunpack.c.l.b16 %v361
  %v726 = vunpack.c.h.b16 %v361
  %v727 = vunpack.c.l.b16 %v362
  %v728 = vunpack.c.h.b16 %v362
  %v729 = vunpack.c.l.b16 %v363
  %v730 = vunpack.c.h.b16 %v363
  %v731 = vunpack.c.l.b16 %v364
  %v732 = vunpack.c.h.b16 %v364
  %v733 = vunpack.c.l.b16 %v365
  %v734 = vunpack.c.h.b16 %v365
  %v735 = vunpack.c.l.b16 %v366
  %v736 = vunpack.c.h.b16 %v366
  %v737 = vunpack.c.l.b16 %v367
  %v738 = vunpack.c.h.b16 %v367
  %v739 = vunpack.c.l.b16 %v368
  %v740 = vunpack.c.h.b16 %v368
  %v741 = vunpack.c.l.b16 %v369
  %v742 = vunpack.c.h.b16 %v369
  %v743 = vunpack.c.l.b16 %v370
  %v744 = vunpack.c.h.b16 %v370
  %v745 = vunpack.c.l.b16 %v371
  %v746 = vunpack.c.h.b16 %v371
  %v747 = vunpack.c.l.b16 %v372
  %v748 = vunpack.c.h.b16 %v372
  %v749 = vunpack.c.l.b16 %v373
  %v750 = vunpack.c.h.b16 %v373
  %v751 = vunpack.c.l.b16 %v374
  %v752 = vunpack.c.h.b16 %v374
  %v753 = vunpack.c.l.b16 %v375
  %v754 = vunpack.c.h.b16 %v375
  %v755 = vunpack.c.l.b16 %v376
  %v756 = vunpack.c.h.b16 %v376
  %v757 = vunpack.c.l.b16 %v377
  %v758 = vunpack.c.h.b16 %v377
  %v759 = vunpack.c.l.b16 %v378
  %v760 = vunpack.c.h.b16 %v378
  %v761 = vunpack.c.l.b16 %v379
  %v762 = vunpack.c.h.b16 %v379
  %v763 = vunpack.c.l.b16 %v380
  %v764 = vunpack.c.h.b16 %v380
  %v765 = vunpack.c.l.b16 %v381
  %v766 = vunpack.c.h.b16 %v381
  %v767 = vunpack.c.l.b16 %v382
  %v768 = vunpack.c.h.b16 %v382
  %v769 = vunpack.c.l.b16 %v383
  %v770 = vunpack.c.h.b16 %v383
  %v771 = vunpack.c.l.b16 %v384
  %v772 = vunpack.c.h.b16 %v384
  %v773 = vunpack.c.l.b16 %v385
  %v774 = vunpack.c.h.b16 %v385
  %v775 = vunpack.c.l.b16 %v386
  %v776 = vunpack.c.h.b16 %v386
  %v777 = vunpack.c.l.b16 %v387
  %v778 = vunpack.c.h.b16 %v387
  %v779 = vunpack.c.l.b16 %v388
  %v780 = vunpack.c.h.b16 %v388
  %v781 = vpack.c.b16 %v529, %v525
  %v782 = vpack.c.b16 %v530, %v526
  %v783 = vpack.c.b16 %v531, %v527
  %v784 = vpack.c.b16 %v532, %v528
  %v785 = vpack.c.b16 %v537, %v533
  %v786 = vpack.c.b16 %v538, %v534
  %v787 = vpack.c.b16 %v539, %v535
  %v788 = vpack.c.b16 %v540, %v536
  %v789 = vpack.c.b16 %v545, %v541
  %v790 = vpack.c.b16 %v546, %v542
  %v791 = vpack.c.b16 %v547, %v543
  %v792 = vpack.c.b16 %v548, %v544
  %v793 = vpack.c.b16 %v553, %v549
  %v794 = vpack.c.b16 %v554, %v550
  %v795 = vpack.c.b16 %v555, %v551
  %v796 = vpack.c.b16 %v556, %v552
  %v797 = vpack.c.b16 %v561, %v557
  %v798 = vpack.c.b16 %v562, %v558
  %v799 = vpack.c.b16 %v563, %v559
  %v800 = vpack.c.b16 %v564, %v560
  %v801 = vpack.c.b16 %v569, %v565
  %v802 = vpack.c.b16 %v570, %v566
  %v803 = vpack.c.b16 %v571, %v567
  %v804 = vpack.c.b16 %v572, %v568
  %v805 = vpack.c.b16 %v577, %v573
  %v806 = vpack.c.b16 %v578, %v574
  %v807 = vpack.c.b16 %v579, %v575
  %v808 = vpack.c.b16 %v580, %v576
  %v809 = vpack.c.b16 %v585, %v581
  %v810 = vpack.c.b16 %v586, %v582
  %v811 = vpack.c.b16 %v587, %v583
  %v812 = vpack.c.b16 %v588, %v584
  %v813 = vpack.c.b16 %v593, %v589
  %v814 = vpack.c.b16 %v594, %v590
  %v815 = vpack.c.b16 %v595, %v591
  %v816 = vpack.c.b16 %v596, %v592
  %v817 = vpack.c.b16 %v601, %v597
  %v818 = vpack.c.b16 %v602, %v598
  %v819 = vpack.c.b16 %v603, %v599
  %v820 = vpack.c.b16 %v604, %v600
  %v821 = vpack.c.b16 %v609, %v605
  %v822 = vpack.c.b16 %v610, %v606
  %v823 = vpack.c.b16 %v611, %v607
  %v824 = vpack.c.b16 %v612, %v608
  %v825 = vpack.c.b16 %v617, %v613
  %v826 = vpack.c.b16 %v618, %v614
  %v827 = vpack.c.b16 %v619, %v615
  %v828 = vpack.c.b16 %v620, %v616
  %v829 = vpack.c.b16 %v625, %v621
  %v830 = vpack.c.b16 %v626, %v622
  %v831 = vpack.c.b16 %v627, %v623
  %v832 = vpack.c.b16 %v628, %v624
  %v833 = vpack.c.b16 %v633, %v629
  %v834 = vpack.c.b16 %v634, %v630
  %v835 = vpack.c.b16 %v635, %v631
  %v836 = vpack.c.b16 %v636, %v632
  %v837 = vpack.c.b16 %v641, %v637
  %v838 = vpack.c.b16 %v642, %v638
  %v839 = vpack.c.b16 %v643, %v639
  %v840 = vpack.c.b16 %v644, %v640
  %v841 = vpack.c.b16 %v649, %v645
  %v842 = vpack.c.b16 %v650, %v646
  %v843 = vpack.c.b16 %v651, %v647
  %v844 = vpack.c.b16 %v652, %v648
  %v845 = vpack.c.b16 %v657, %v653
  %v846 = vpack.c.b16 %v658, %v654
  %v847 = vpack.c.b16 %v659, %v655
  %v848 = vpack.c.b16 %v660, %v656
  %v849 = vpack.c.b16 %v665, %v661
  %v850 = vpack.c.b16 %v666, %v662
  %v851 = vpack.c.b16 %v667, %v663
  %v852 = vpack.c.b16 %v668, %v664
  %v853 = vpack.c.b16 %v673, %v669
  %v854 = vpack.c.b16 %v674, %v670
  %v855 = vpack.c.b16 %v675, %v671
  %v856 = vpack.c.b16 %v676, %v672
  %v857 = vpack.c.b16 %v681, %v677
  %v858 = vpack.c.b16 %v682, %v678
  %v859 = vpack.c.b16 %v683, %v679
  %v860 = vpack.c.b16 %v684, %v680
  %v861 = vpack.c.b16 %v689, %v685
  %v862 = vpack.c.b16 %v690, %v686
  %v863 = vpack.c.b16 %v691, %v687
  %v864 = vpack.c.b16 %v692, %v688
  %v865 = vpack.c.b16 %v697, %v693
  %v866 = vpack.c.b16 %v698, %v694
  %v867 = vpack.c.b16 %v699, %v695
  %v868 = vpack.c.b16 %v700, %v696
  %v869 = vpack.c.b16 %v705, %v701
  %v870 = vpack.c.b16 %v706, %v702
  %v871 = vpack.c.b16 %v707, %v703
  %v872 = vpack.c.b16 %v708, %v704
  %v873 = vpack.c.b16 %v713, %v709
  %v874 = vpack.c.b16 %v714, %v710
  %v875 = vpack.c.b16 %v715, %v711
  %v876 = vpack.c.b16 %v716, %v712
  %v877 = vpack.c.b16 %v721, %v717
  %v878 = vpack.c.b16 %v722, %v718
  %v879 = vpack.c.b16 %v723, %v719
  %v880 = vpack.c.b16 %v724, %v720
  %v881 = vpack.c.b16 %v729, %v725
  %v882 = vpack.c.b16 %v730, %v726
  %v883 = vpack.c.b16 %v731, %v727
  %v884 = vpack.c.b16 %v732, %v728
  %v885 = vpack.c.b16 %v737, %v733
  %v886 = vpack.c.b16 %v738, %v734
  %v887 = vpack.c.b16 %v739, %v735
  %v888 = vpack.c.b16 %v740, %v736
  %v889 = vpack.c.b16 %v745, %v741
  %v890 = vpack.c.b16 %v746, %v742
  %v891 = vpack.c.b16 %v747, %v743
  %v892 = vpack.c.b16 %v748, %v744
  %v893 = vpack.c.b16 %v753, %v749
  %v894 = vpack.c.b16 %v754, %v750
  %v895 = vpack.c.b16 %v755, %v751
  %v896 = vpack.c.b16 %v756, %v752
  %v897 = vpack.c.b16 %v761, %v757
  %v898 = vpack.c.b16 %v762, %v758
  %v899 = vpack.c.b16 %v763, %v759
  %v900 = vpack.c.b16 %v764, %v760
  %v901 = vpack.c.b16 %v769, %v765
  %v902 = vpack.c.b16 %v770, %v766
  %v903 = vpack.c.b16 %v771, %v767
  %v904 = vpack.c.b16 %v772, %v768
  %v905 = vpack.c.b16 %v777, %v773
  %v906 = vpack.c.b16 %v778, %v774
  %v907 = vpack.c.b16 %v779, %v775
  %v908 = vpack.c.b16 %v780, %v776
  %1037 = vmatprep.subr.bf16.mxu0 %v782
  %1038 = vmatpush1.bf16.msra.mxu0 %v781
  %1039 = vmatprep.subr.bf16.mxu0 %v786
  %1040 = vmatpush1.bf16.msra.mxu0 %v785
  %1041 = vmatprep.subr.bf16.mxu0 %v790
  %1042 = vmatpush1.bf16.msra.mxu0 %v789
  %1043 = vmatprep.subr.bf16.mxu0 %v794
  %1044 = vmatpush1.bf16.msra.mxu0 %v793
  %1045 = vmatprep.subr.bf16.mxu0 %v798
  %1046 = vmatpush1.bf16.msra.mxu0 %v797
  %1047 = vmatprep.subr.bf16.mxu0 %v802
  %1048 = vmatpush1.bf16.msra.mxu0 %v801
  %1049 = vmatprep.subr.bf16.mxu0 %v806
  %1050 = vmatpush1.bf16.msra.mxu0 %v805
  %1051 = vmatprep.subr.bf16.mxu0 %v810
  %1052 = vmatpush1.bf16.msra.mxu0 %v809
  %1053 = vmatprep.subr.bf16.mxu0 %v814
  %1054 = vmatpush1.bf16.msra.mxu0 %v813
  %1055 = vmatprep.subr.bf16.mxu0 %v818
  %1056 = vmatpush1.bf16.msra.mxu0 %v817
  %1057 = vmatprep.subr.bf16.mxu0 %v822
  %1058 = vmatpush1.bf16.msra.mxu0 %v821
  %1059 = vmatprep.subr.bf16.mxu0 %v826
  %1060 = vmatpush1.bf16.msra.mxu0 %v825
  %1061 = vmatprep.subr.bf16.mxu0 %v830
  %1062 = vmatpush1.bf16.msra.mxu0 %v829
  %1063 = vmatprep.subr.bf16.mxu0 %v834
  %1064 = vmatpush1.bf16.msra.mxu0 %v833
  %1065 = vmatprep.subr.bf16.mxu0 %v838
  %1066 = vmatpush1.bf16.msra.mxu0 %v837
  %1067 = vmatprep.subr.bf16.mxu0 %v842
  %1068 = vmatpush1.bf16.msra.mxu0 %v841
  %1069 = vmatprep.mubr.bf16.mxu0 %v390
  %1070 = vmatmul.mubr.bf16.gmra.mrb[0].mxu0 %v389
  %v1071 = vpop.f32.mrb[0].mxu0
  %v1072 = vadd.f32 0.0, %v1071
  %v1073 = vpop.f32.mrb[0].mxu0
  %v1074 = vadd.f32 0.0, %v1073
  %v1075 = vpop.f32.mrb[0].mxu0
  %v1076 = vadd.f32 0.0, %v1075
  %v1077 = vpop.f32.mrb[0].mxu0
  %v1078 = vadd.f32 0.0, %v1077
  %1079 = vdwg.mxu0
  %1080 = vmatprep.subr.bf16.mxu0 %v846
  %1081 = vmatpush1.bf16.msra.mxu0 %v845
  %1082 = vmatprep.subr.bf16.mxu0 %v850
  %1083 = vmatpush1.bf16.msra.mxu0 %v849
  %1084 = vmatprep.subr.bf16.mxu0 %v854
  %1085 = vmatpush1.bf16.msra.mxu0 %v853
  %1086 = vmatprep.subr.bf16.mxu0 %v858
  %1087 = vmatpush1.bf16.msra.mxu0 %v857
  %1088 = vmatprep.subr.bf16.mxu0 %v862
  %1089 = vmatpush1.bf16.msra.mxu0 %v861
  %1090 = vmatprep.subr.bf16.mxu0 %v866
  %1091 = vmatpush1.bf16.msra.mxu0 %v865
  %1092 = vmatprep.subr.bf16.mxu0 %v870
  %1093 = vmatpush1.bf16.msra.mxu0 %v869
  %1094 = vmatprep.subr.bf16.mxu0 %v874
  %1095 = vmatpush1.bf16.msra.mxu0 %v873
  %1096 = vmatprep.subr.bf16.mxu0 %v878
  %1097 = vmatpush1.bf16.msra.mxu0 %v877
  %1098 = vmatprep.subr.bf16.mxu0 %v882
  %1099 = vmatpush1.bf16.msra.mxu0 %v881
  %1100 = vmatprep.subr.bf16.mxu0 %v886
  %1101 = vmatpush1.bf16.msra.mxu0 %v885
  %1102 = vmatprep.subr.bf16.mxu0 %v890
  %1103 = vmatpush1.bf16.msra.mxu0 %v889
  %1104 = vmatprep.subr.bf16.mxu0 %v894
  %1105 = vmatpush1.bf16.msra.mxu0 %v893
  %1106 = vmatprep.subr.bf16.mxu0 %v898
  %1107 = vmatpush1.bf16.msra.mxu0 %v897
  %1108 = vmatprep.subr.bf16.mxu0 %v902
  %1109 = vmatpush1.bf16.msra.mxu0 %v901
  %1110 = vmatprep.subr.bf16.mxu0 %v906
  %1111 = vmatpush1.bf16.msra.mxu0 %v905
  %1112 = vmatprep.mubr.bf16.mxu0 %v392
  %1113 = vmatmul.mubr.bf16.gmra.mrb[0].mxu0 %v391
  %v1114 = vpop.f32.mrb[0].mxu0
  %v1115 = vadd.f32 %v1072, %v1114
  %v1116 = vpop.f32.mrb[0].mxu0
  %v1117 = vadd.f32 %v1074, %v1116
  %v1118 = vpop.f32.mrb[0].mxu0
  %v1119 = vadd.f32 %v1076, %v1118
  %v1120 = vpop.f32.mrb[0].mxu0
  %v1121 = vadd.f32 %v1078, %v1120
  %1122 = vdwg.mxu0
  %1123 = vmatprep.subr.bf16.mxu0 %v784
  %1124 = vmatpush1.bf16.msra.mxu0 %v783
  %1125 = vmatprep.subr.bf16.mxu0 %v788
  %1126 = vmatpush1.bf16.msra.mxu0 %v787
  %1127 = vmatprep.subr.bf16.mxu0 %v792
  %1128 = vmatpush1.bf16.msra.mxu0 %v791
  %1129 = vmatprep.subr.bf16.mxu0 %v796
  %1130 = vmatpush1.bf16.msra.mxu0 %v795
  %1131 = vmatprep.subr.bf16.mxu0 %v800
  %1132 = vmatpush1.bf16.msra.mxu0 %v799
  %1133 = vmatprep.subr.bf16.mxu0 %v804
  %1134 = vmatpush1.bf16.msra.mxu0 %v803
  %1135 = vmatprep.subr.bf16.mxu0 %v808
  %1136 = vmatpush1.bf16.msra.mxu0 %v807
  %1137 = vmatprep.subr.bf16.mxu0 %v812
  %1138 = vmatpush1.bf16.msra.mxu0 %v811
  %1139 = vmatprep.subr.bf16.mxu0 %v816
  %1140 = vmatpush1.bf16.msra.mxu0 %v815
  %1141 = vmatprep.subr.bf16.mxu0 %v820
  %1142 = vmatpush1.bf16.msra.mxu0 %v819
  %1143 = vmatprep.subr.bf16.mxu0 %v824
  %1144 = vmatpush1.bf16.msra.mxu0 %v823
  %1145 = vmatprep.subr.bf16.mxu0 %v828
  %1146 = vmatpush1.bf16.msra.mxu0 %v827
  %1147 = vmatprep.subr.bf16.mxu0 %v832
  %1148 = vmatpush1.bf16.msra.mxu0 %v831
  %1149 = vmatprep.subr.bf16.mxu0 %v836
  %1150 = vmatpush1.bf16.msra.mxu0 %v835
  %1151 = vmatprep.subr.bf16.mxu0 %v840
  %1152 = vmatpush1.bf16.msra.mxu0 %v839
  %1153 = vmatprep.subr.bf16.mxu0 %v844
  %1154 = vmatpush1.bf16.msra.mxu0 %v843
  %1155 = vmatprep.mubr.bf16.mxu0 %v390
  %1156 = vmatmul.mubr.bf16.gmra.mrb[0].mxu0 %v389
  %v1157 = vpop.f32.mrb[0].mxu0
  %v1158 = vadd.f32 0.0, %v1157
  %v1159 = vpop.f32.mrb[0].mxu0
  %v1160 = vadd.f32 0.0, %v1159
  %v1161 = vpop.f32.mrb[0].mxu0
  %v1162 = vadd.f32 0.0, %v1161
  %v1163 = vpop.f32.mrb[0].mxu0
  %v1164 = vadd.f32 0.0, %v1163
  %1165 = vdwg.mxu0
  %1166 = vmatprep.subr.bf16.mxu0 %v848
  %1167 = vmatpush1.bf16.msra.mxu0 %v847
  %1168 = vmatprep.subr.bf16.mxu0 %v852
  %1169 = vmatpush1.bf16.msra.mxu0 %v851
  %1170 = vmatprep.subr.bf16.mxu0 %v856
  %1171 = vmatpush1.bf16.msra.mxu0 %v855
  %1172 = vmatprep.subr.bf16.mxu0 %v860
  %1173 = vmatpush1.bf16.msra.mxu0 %v859
  %1174 = vmatprep.subr.bf16.mxu0 %v864
  %1175 = vmatpush1.bf16.msra.mxu0 %v863
  %1176 = vmatprep.subr.bf16.mxu0 %v868
  %1177 = vmatpush1.bf16.msra.mxu0 %v867
  %1178 = vmatprep.subr.bf16.mxu0 %v872
  %1179 = vmatpush1.bf16.msra.mxu0 %v871
  %1180 = vmatprep.subr.bf16.mxu0 %v876
  %1181 = vmatpush1.bf16.msra.mxu0 %v875
  %1182 = vmatprep.subr.bf16.mxu0 %v880
  %1183 = vmatpush1.bf16.msra.mxu0 %v879
  %1184 = vmatprep.subr.bf16.mxu0 %v884
  %1185 = vmatpush1.bf16.msra.mxu0 %v883
  %1186 = vmatprep.subr.bf16.mxu0 %v888
  %1187 = vmatpush1.bf16.msra.mxu0 %v887
  %1188 = vmatprep.subr.bf16.mxu0 %v892
  %1189 = vmatpush1.bf16.msra.mxu0 %v891
  %1190 = vmatprep.subr.bf16.mxu0 %v896
  %1191 = vmatpush1.bf16.msra.mxu0 %v895
  %1192 = vmatprep.subr.bf16.mxu0 %v900
  %1193 = vmatpush1.bf16.msra.mxu0 %v899
  %1194 = vmatprep.subr.bf16.mxu0 %v904
  %1195 = vmatpush1.bf16.msra.mxu0 %v903
  %1196 = vmatprep.subr.bf16.mxu0 %v908
  %1197 = vmatpush1.bf16.msra.mxu0 %v907
  %1198 = vmatprep.mubr.bf16.mxu0 %v392
  %1199 = vmatmul.mubr.bf16.gmra.mrb[0].mxu0 %v391
  %v1200 = vpop.f32.mrb[0].mxu0
  %v1201 = vadd.f32 %v1158, %v1200
  %v1202 = vpop.f32.mrb[0].mxu0
  %v1203 = vadd.f32 %v1160, %v1202
  %v1204 = vpop.f32.mrb[0].mxu0
  %v1205 = vadd.f32 %v1162, %v1204
  %v1206 = vpop.f32.mrb[0].mxu0
  %v1207 = vadd.f32 %v1164, %v1206
  %1208 = vdwg.mxu0
  %1209 = vst [vmem:[%s3] sm:$0xff] %v1115
  %1210 = vst [vmem:[%s3 + $0x8] sm:$0xff] %v1117
  %1211 = vst [vmem:[%s3 + $0x10] sm:$0xff] %v1201
  %1212 = vst [vmem:[%s3 + $0x18] sm:$0xff] %v1203
  %1213 = vst [vmem:[%s3 + $0x20] sm:$0xff] %v1119
  %1214 = vst [vmem:[%s3 + $0x28] sm:$0xff] %v1121
  %1215 = vst [vmem:[%s3 + $0x30] sm:$0xff] %v1205
  %1216 = vst [vmem:[%s3 + $0x38] sm:$0xff] %v1207
  // Predicated region
  $region14: #{gcn_forward.1} parent=0 // pred_check
    _
  $region15: #{gcn_forward.1} parent=0 // pred_check_branch
    %1218 = sbr.rel (0) target = $region17
  $region16: #{gcn_forward.1} parent=0 // pred_region
    _
  $region17: #{gcn_forward.1} parent=0 // pred_fallthru
    _
  // Predicated region
  $region18: #{gcn_forward.1} parent=0 // pred_check
    _
  $region19: #{gcn_forward.1} parent=0 // pred_check_branch
    %1220 = sbr.rel (0) target = $region21
  $region20: #{gcn_forward.1} parent=0 // pred_region
    _
  $region21: #{gcn_forward.1} parent=0 // pred_fallthru
    _

</llo_original>
